<compile_context>
chip_gen: v6e
topology: v6e:2x2x1
jax: 0.10.0
libtpu: 0.0.40
codegen_flags: <defaults>
</compile_context>

<pallas_src>
import jax
import jax.numpy as jnp
from jax.experimental import pallas as pl
from jax.experimental.pallas import tpu as pltpu


def _kl_kernel(z1_ref, z2_ref, out_ref):
    """One row-tile: per-lane partial sums of q * (log q - log p)."""
    z1 = z1_ref[...].astype(jnp.float32)
    z2 = z2_ref[...].astype(jnp.float32)

    # log-softmax stats for z1 (only the per-row logsumexp is needed).
    m1 = jnp.max(z1, axis=-1, keepdims=True)                    # (T, 1)
    lse1 = jnp.log(jnp.sum(jnp.exp(z1 - m1), axis=-1, keepdims=True)) + m1

    # softmax / log-softmax for z2.
    z2c = z2 - jnp.max(z2, axis=-1, keepdims=True)              # (T, D)
    e2 = jnp.exp(z2c)                                           # (T, D)
    s2 = jnp.sum(e2, axis=-1, keepdims=True)                    # (T, 1)
    # Exact reciprocal: only (T, 1) elements, essentially free.
    q = e2 * pl.reciprocal(s2, approx=False)                    # (T, D)

    # log q - log p  ==  (z2c - log s2) - (z1 - lse1)
    #                ==  (z2c - z1) + (lse1 - log s2)   [fused: 2 VALU ops/elem]
    row_const = lse1 - jnp.log(s2)                              # (T, 1)
    term = q * ((z2c - z1) + row_const)                         # (T, D)

    # Sublane (row) reduce only; keep the output lane-dense.  Cross-lane
    # reduce and division by N*D are deferred to the wrapper.
    partial = jnp.sum(term, axis=0, keepdims=True)              # (1, D)
    out_ref[...] = partial.reshape(out_ref.shape)               # (1, 1, D)


def _choose_tile_rows(n_rows, d, itemsize):
    """Largest row tile whose double-buffered inputs stay well inside VMEM."""
    try:
        vmem_bytes = pltpu.get_tpu_info().vmem_capacity_bytes
    except Exception:  # interpret mode / non-TPU fallback
        vmem_bytes = 64 * 1024 * 1024  # conservative (v7x per-TC VMEM)
    budget = vmem_bytes // 16                       # generous headroom vs. scoped limit
    per_row_bytes = 2 * 2 * d * itemsize            # 2 inputs x 2 pipeline buffers
    t = max(8, budget // max(per_row_bytes, 1))
    t = min(t, 1024, n_rows)                        # >=512 rows already ~85% of roofline
    if t < n_rows:
        # Block rows must be a multiple of 8 (f32) / 16 (bf16 packing) unless
        # they span the full row extent.
        mult = 16 if t >= 16 else 8
        t = max(mult, (t // mult) * mult)
    return int(max(t, 1))


def kl_loss(z1, z2, *, tile_rows=None):
    """Equivalent of F.kl_div(z1.softmax(-1).log(), z2.softmax(-1), reduction='mean')."""
    assert z1.shape == z2.shape, "z1 and z2 must have the same shape"
    d = z1.shape[-1]
    n = z1.size // d
    z1 = z1.reshape(n, d)
    z2 = z2.reshape(n, d)
    total_elems = n * d
    itemsize = jnp.dtype(z1.dtype).itemsize

    t = int(tile_rows) if tile_rows is not None else _choose_tile_rows(n, d, itemsize)
    t = min(t, n)

    # Pad rows up to a multiple of the tile; all-zero rows contribute exactly 0
    # to the KL sum (q = 1/D, log q == log p), so no masking is required.
    pad = (-n) % t
    if pad:
        z1 = jnp.pad(z1, ((0, pad), (0, 0)))
        z2 = jnp.pad(z2, ((0, pad), (0, 0)))
    num_tiles = (n + pad) // t

    cost = pl.CostEstimate(
        flops=8 * total_elems,
        transcendentals=2 * total_elems,
        bytes_accessed=2 * (n + pad) * d * itemsize + num_tiles * d * 4,
    )

    partials = pl.pallas_call(
        _kl_kernel,
        out_shape=jax.ShapeDtypeStruct((num_tiles, 1, d), jnp.float32),
        grid_spec=pltpu.PrefetchScalarGridSpec(
            num_scalar_prefetch=0,
            grid=(num_tiles,),
            in_specs=[
                pl.BlockSpec((t, d), lambda i: (i, 0)),
                pl.BlockSpec((t, d), lambda i: (i, 0)),
            ],
            out_specs=pl.BlockSpec((1, 1, d), lambda i: (i, 0, 0)),
        ),
        compiler_params=pltpu.CompilerParams(
            dimension_semantics=("parallel",),  # no carried state -> megacore-safe
        ),
        cost_estimate=cost,
    )(z1, z2)

    # Final cross-lane reduce + mean over ALL elements (PyTorch reduction='mean').
    return jnp.sum(partials) / jnp.float32(total_elems)


def _kl_ref(z1, z2):
    log_p = jax.nn.log_softmax(z1, axis=-1)
    log_q = jax.nn.log_softmax(z2, axis=-1)
    q = jax.nn.softmax(z2, axis=-1)
    return jnp.mean(q * (log_q - log_p))


if __name__ == "__main__":
    key = jax.random.PRNGKey(0)
    k1, k2 = jax.random.split(key)

    # Small shapes consistent with the module: flattened batch=16, feature dim=128.
    z1 = jax.random.normal(k1, (16, 128), dtype=jnp.float32)
    z2 = jax.random.normal(k2, (16, 128), dtype=jnp.float32)

    kl = kl_loss(z1, z2)
    jax.block_until_ready(kl)
    ref = _kl_ref(z1, z2)
    assert jnp.allclose(kl, ref, atol=1e-5, rtol=1e-5), (kl, ref)

    # Exercise the row-padding path (N not divisible by the tile).
    z1b = jax.random.normal(k1, (20, 128), dtype=jnp.float32)
    z2b = jax.random.normal(k2, (20, 128), dtype=jnp.float32)
    kl_b = kl_loss(z1b, z2b, tile_rows=8)
    jax.block_until_ready(kl_b)
    ref_b = _kl_ref(z1b, z2b)
    assert jnp.allclose(kl_b, ref_b, atol=1e-5, rtol=1e-5), (kl_b, ref_b)

    print("KERNEL_OK")
</pallas_src>

<mosaic_0001>
module attributes {stable_mosaic.version = 11 : i64} {
  func.func @_kl_kernel(%arg0: i32, %arg1: memref<16x128xf32, #tpu.memory_space<vmem>>, %arg2: memref<16x128xf32, #tpu.memory_space<vmem>>, %arg3: memref<1x1x128xf32, #tpu.memory_space<vmem>>) attributes {dimension_semantics = [#tpu.dimension_semantics<parallel>], iteration_bounds = array<i64: 1>, scalar_prefetch = 0 : i64, scratch_operands = 0 : i64, tpu.core_type = #tpu.core_type<tc>, window_params = [{transform_indices = @transform_0, window_bounds = array<i64: 16, 128>}, {transform_indices = @transform_1, window_bounds = array<i64: 16, 128>}, {transform_indices = @transform_2, window_bounds = array<i64: 1, 1, 128>}]} {
    %c0 = arith.constant 0 : index
    %c0_0 = arith.constant 0 : index
    %0 = vector.load %arg1[%c0, %c0_0] : memref<16x128xf32, #tpu.memory_space<vmem>>, vector<16x128xf32>
    %c0_1 = arith.constant 0 : index
    %c0_2 = arith.constant 0 : index
    %1 = vector.load %arg2[%c0_1, %c0_2] : memref<16x128xf32, #tpu.memory_space<vmem>>, vector<16x128xf32>
    %cst = arith.constant dense<0xFF800000> : vector<16xf32>
    %2 = vector.multi_reduction <maximumf>, %0, %cst [1] : vector<16x128xf32> to vector<16xf32>
    %3 = vector.shape_cast %2 : vector<16xf32> to vector<16x1xf32>
    %4 = vector.broadcast %3 : vector<16x1xf32> to vector<16x128xf32>
    %5 = arith.subf %0, %4 : vector<16x128xf32>
    %6 = math.exp %5 : vector<16x128xf32>
    %cst_3 = arith.constant dense<0.000000e+00> : vector<16xf32>
    %7 = vector.multi_reduction <add>, %6, %cst_3 [1] : vector<16x128xf32> to vector<16xf32>
    %8 = vector.shape_cast %7 : vector<16xf32> to vector<16x1xf32>
    %9 = math.log %8 : vector<16x1xf32>
    %10 = arith.addf %9, %3 : vector<16x1xf32>
    %cst_4 = arith.constant dense<0xFF800000> : vector<16xf32>
    %11 = vector.multi_reduction <maximumf>, %1, %cst_4 [1] : vector<16x128xf32> to vector<16xf32>
    %12 = vector.shape_cast %11 : vector<16xf32> to vector<16x1xf32>
    %13 = vector.broadcast %12 : vector<16x1xf32> to vector<16x128xf32>
    %14 = arith.subf %1, %13 : vector<16x128xf32>
    %15 = math.exp %14 : vector<16x128xf32>
    %cst_5 = arith.constant dense<0.000000e+00> : vector<16xf32>
    %16 = vector.multi_reduction <add>, %15, %cst_5 [1] : vector<16x128xf32> to vector<16xf32>
    %17 = vector.shape_cast %16 : vector<16xf32> to vector<16x1xf32>
    %18 = tpu.reciprocal %17 : vector<16x1xf32> -> vector<16x1xf32>
    %19 = vector.broadcast %18 : vector<16x1xf32> to vector<16x128xf32>
    %20 = arith.mulf %15, %19 : vector<16x128xf32>
    %21 = math.log %17 : vector<16x1xf32>
    %22 = arith.subf %10, %21 : vector<16x1xf32>
    %23 = arith.subf %14, %0 : vector<16x128xf32>
    %24 = vector.broadcast %22 : vector<16x1xf32> to vector<16x128xf32>
    %25 = arith.addf %23, %24 : vector<16x128xf32>
    %26 = arith.mulf %20, %25 : vector<16x128xf32>
    %cst_6 = arith.constant dense<0.000000e+00> : vector<128xf32>
    %27 = vector.multi_reduction <add>, %26, %cst_6 [0] : vector<16x128xf32> to vector<128xf32>
    %28 = vector.shape_cast %27 : vector<128xf32> to vector<1x128xf32>
    %29 = vector.shape_cast %28 : vector<1x128xf32> to vector<1x1x128xf32>
    %c0_7 = arith.constant 0 : index
    %c0_8 = arith.constant 0 : index
    %c0_9 = arith.constant 0 : index
    %30 = vector.load %arg3[%c0_7, %c0_8, %c0_9] : memref<1x1x128xf32, #tpu.memory_space<vmem>>, vector<1x1x128xf32>
    tpu.vector_store %arg3[%c0_7, %c0_8, %c0_9], %29 {strides = array<i32>} : memref<1x1x128xf32, #tpu.memory_space<vmem>>, vector<1x1x128xf32>,
    return
  }
  func.func @transform_0(%arg0: i32) -> (i32, i32) {
    %c0_i32 = arith.constant 0 : i32
    %c0_i32_0 = arith.constant 0 : i32
    return %arg0, %c0_i32 : i32, i32
  }
  func.func @transform_1(%arg0: i32) -> (i32, i32) {
    %c0_i32 = arith.constant 0 : i32
    %c0_i32_0 = arith.constant 0 : i32
    return %arg0, %c0_i32 : i32, i32
  }
  func.func @transform_2(%arg0: i32) -> (i32, i32, i32) {
    %c0_i32 = arith.constant 0 : i32
    %c0_i32_0 = arith.constant 0 : i32
    %c0_i32_1 = arith.constant 0 : i32
    return %arg0, %c0_i32, %c0_i32_0 : i32, i32, i32
  }
}

</mosaic_0001>

<llo_original>
// kernel: tpu_custom_call.1
$region0: #{tpu_custom_call.1}
  #allocation0 [shape = 'u32[]', space=smem, size = 0x4, offset = 0x4, fixed_abs, tag = 'smem constant byte address 0x4 - core index']
  #allocation1 [shape = 'u32[144,128]{1,0:T(1,128)}', space=vmem, size = 0x12000, scoped, tag = 'internal scratch']
  %s0 = inlined_call_operand.hbm [shape: f32[16,128], index: 0, kind: input, shape index: {}]
  %s1 = inlined_call_operand.hbm [shape: f32[16,128], index: 1, kind: input, shape index: {}]
  %s2 = inlined_call_operand.hbm [shape: f32[1,1,128], index: 2, kind: output, shape index: {}]
  %s3 = sld [smem:[#allocation0]]
  $region26: #{tpu_custom_call.1} parent=0
    _
  %s5 = ssub.s32 1, %s3
  %s6 = scalar_select 0, %s5, %s3
  $region1: #{tpu_custom_call.1} parent=0
    #allocation2 [shape = 'u8[8192]{0}', space=vmem, size = 0x2000, scoped, tag = 'input window, operand 0, single buffered']
    #allocation3 [shape = 's32[1]{0}', space=sflag, size = 0x4, scoped, tag = 'scoped memory for tpu_custom_call.1']
    #allocation4 [shape = 's32[1]{0}', space=sflag, size = 0x4, scoped, tag = 'scoped memory for tpu_custom_call.1']
    #allocation5 [shape = 'u8[8192]{0}', space=vmem, size = 0x2000, scoped, tag = 'input window, operand 1, single buffered']
    #allocation6 [shape = 's32[1]{0}', space=sflag, size = 0x4, scoped, tag = 'scoped memory for tpu_custom_call.1']
    #allocation7 [shape = 'u8[512]{0}', space=vmem, size = 0x400, scoped, tag = 'output window, operand 0, single buffered']
    %7 = vsyncpa [#allocation3], 0
    %8 = vsyncpa [#allocation6], 0
    %9 = vsyncpa [#allocation4], 0
    // Predicated region
    $region2: #{tpu_custom_call.1} parent=1 // pred_check
      _
    $region3: #{tpu_custom_call.1} parent=1 // pred_check_branch
      %11 = sbr.rel (0) target = $region5
    $region4: #{tpu_custom_call.1} parent=1 // pred_region
      %s13 = ssub.s32 256, 256
      %14 = vsyncadd [#allocation3], %s13
      %s15 = sshll.u32 [#allocation2], 4
      %s16 = int_to_ptr.vmem [resolvable:$true] %s15
      %21 = dma.hbm_to_vmem [thread:$0]  %s0, 256, %s16, [#allocation3], 128, 128, 8
    $region5: #{tpu_custom_call.1} parent=1 // pred_fallthru
      _
    // Predicated region
    $region6: #{tpu_custom_call.1} parent=1 // pred_check
      _
    $region7: #{tpu_custom_call.1} parent=1 // pred_check_branch
      %23 = sbr.rel (0) target = $region9
    $region8: #{tpu_custom_call.1} parent=1 // pred_region
      %s25 = ssub.s32 256, 256
      %26 = vsyncadd [#allocation6], %s25
      %s27 = sshll.u32 [#allocation5], 4
      %s28 = int_to_ptr.vmem [resolvable:$true] %s27
      %33 = dma.hbm_to_vmem [thread:$0]  %s1, 256, %s28, [#allocation6], 128, 128, 8
    $region9: #{tpu_custom_call.1} parent=1 // pred_fallthru
      _
    // Predicated region
    $region10: #{tpu_custom_call.1} parent=1 // pred_check
      _
    $region11: #{tpu_custom_call.1} parent=1 // pred_check_branch
      %35 = sbr.rel (0) target = $region13
    $region12: #{tpu_custom_call.1} parent=1 // pred_region
      %36 = dma.done [#allocation3], 256
    $region13: #{tpu_custom_call.1} parent=1 // pred_fallthru
      _
    // Predicated region
    $region14: #{tpu_custom_call.1} parent=1 // pred_check
      _
    $region15: #{tpu_custom_call.1} parent=1 // pred_check_branch
      %38 = sbr.rel (0) target = $region17
    $region16: #{tpu_custom_call.1} parent=1 // pred_region
      %39 = dma.done [#allocation6], 256
    $region17: #{tpu_custom_call.1} parent=1 // pred_fallthru
      _
    %v40 = vld [vmem:[#allocation2] sm:$0xff]
    %v41 = vld [vmem:[#allocation2 + $0x8] sm:$0xff]
    %v42 = vld [vmem:[#allocation5] sm:$0xff]
    %v43 = vld [vmem:[#allocation5 + $0x8] sm:$0xff]
    %44 = vmax.xlane.f32.xlu0 %v40
    %v45 = vpop.xlane.xlu0 %44
    %46 = vmax.xlane.f32.xlu0 %v41
    %v47 = vpop.xlane.xlu0 %46
    %v48 = vsub.f32 %v40, %v45
    %v49 = vsub.f32 %v41, %v47
    %v50 = vmul.f32 %v48, 1.442695
    %v51 = vpow.pop %v50
    %v52 = vmul.f32 %v49, 1.442695
    %v53 = vpow.pop %v52
    %54 = vadd.xlane.f32.xlu0 %v51
    %v55 = vpop.xlane.xlu0 %54
    %56 = vadd.xlane.f32.xlu0 %v53
    %v57 = vpop.xlane.xlu0 %56
    %v58 = vlog2.pop %v55
    %v59 = vmul.f32 %v58, 0.6931472
    %v60 = vlog2.pop %v57
    %v61 = vmul.f32 %v60, 0.6931472
    %v62 = vadd.f32 %v59, %v45
    %v63 = vadd.f32 %v61, %v47
    %64 = vmax.xlane.f32.xlu0 %v42
    %v65 = vpop.xlane.xlu0 %64
    %66 = vmax.xlane.f32.xlu0 %v43
    %v67 = vpop.xlane.xlu0 %66
    %v68 = vsub.f32 %v42, %v65
    %v69 = vsub.f32 %v43, %v67
    %v70 = vmul.f32 %v68, 1.442695
    %v71 = vpow.pop %v70
    %v72 = vmul.f32 %v69, 1.442695
    %v73 = vpow.pop %v72
    %74 = vadd.xlane.f32.xlu0 %v71
    %v75 = vpop.xlane.xlu0 %74
    %76 = vadd.xlane.f32.xlu0 %v73
    %v77 = vpop.xlane.xlu0 %76
    %v78 = vrcp.pop %v75
    %v79 = vrcp.pop %v77
    %v80 = vmul.f32 %v71, %v78
    %v81 = vmul.f32 %v73, %v79
    %v82 = vlog2.pop %v75
    %v83 = vmul.f32 %v82, 0.6931472
    %v84 = vlog2.pop %v77
    %v85 = vmul.f32 %v84, 0.6931472
    %v86 = vsub.f32 %v62, %v83
    %v87 = vsub.f32 %v63, %v85
    %v88 = vsub.f32 %v68, %v40
    %v89 = vsub.f32 %v69, %v41
    %v90 = vadd.f32 %v88, %v86
    %v91 = vadd.f32 %v89, %v87
    %v92 = vmul.f32 %v80, %v90
    %v93 = vmul.f32 %v81, %v91
    %v94 = vadd.f32 %v92, %v93
    %v95 = vrot.slane %v94, 4
    %v96 = vadd.f32 %v94, %v95
    %v97 = vrot.slane %v96, 2
    %v98 = vadd.f32 %v96, %v97
    %v99 = vrot.slane %v98, 1
    %v100 = vadd.f32 %v98, %v99
    %101 = vst [vmem:[#allocation7] sm:$0x1] %v100
    // Predicated region
    $region18: #{tpu_custom_call.1} parent=1 // pred_check
      _
    $region19: #{tpu_custom_call.1} parent=1 // pred_check_branch
      %103 = sbr.rel (0) target = $region21
    $region20: #{tpu_custom_call.1} parent=1 // pred_region
      %s105 = ssub.s32 16, 16
      %106 = vsyncadd [#allocation4], %s105
      %s108 = sshll.u32 [#allocation7], 4
      %s109 = int_to_ptr.vmem [resolvable:$true] %s108
      %111 = dma.vmem_to_hbm [thread:$0]  %s109, 16, %s2, [#allocation4]
    $region21: #{tpu_custom_call.1} parent=1 // pred_fallthru
      _
    // Predicated region
    $region22: #{tpu_custom_call.1} parent=1 // pred_check
      _
    $region23: #{tpu_custom_call.1} parent=1 // pred_check_branch
      %113 = sbr.rel (0) target = $region25
    $region24: #{tpu_custom_call.1} parent=1 // pred_region
      %114 = dma.done [#allocation4], 16
    $region25: #{tpu_custom_call.1} parent=1 // pred_fallthru
      _
    %115 = vsyncpa [#allocation3], 1
    %116 = vsyncpa [#allocation6], 1
    %117 = vsyncpa [#allocation4], 1

</llo_original>
